<compile_context>
chip_gen: v6e
topology: v6e:2x2x1
jax: 0.10.0
libtpu: 0.0.40
codegen_flags: <defaults>
</compile_context>

<pallas_src>
import functools

import jax
import jax.numpy as jnp
from jax.experimental import pallas as pl
from jax.experimental.pallas import tpu as pltpu


def _supcon_kernel(labq_ref, labk_ref, fq_ref, fk_ref, o_ref,
                   m_sc, l_sc, s_sc, n_sc, *, inv_temp, loss_scale):
    """One (query-tile, key-tile) step of the tiled SupCon forward.

    labq_ref: [TQ, 1] int32   labels of the query rows
    labk_ref: [1, TK] int32   labels of the key columns
    fq_ref:   [TQ, D]         query features (input dtype, fed to the MXU as-is)
    fk_ref:   [TK, D]         key features
    o_ref:    [TQ, 1] f32     per-anchor loss (written on the last key step)
    scratch ([TQ,1] f32):     m = running max, l = running masked exp-sum,
                              s = running sum(mask*logits), n = running positive count
    """
    q = pl.program_id(0)
    k = pl.program_id(1)
    nk = pl.num_programs(1)

    @pl.when(k == 0)
    def _init():
        m_sc[...] = jnp.full(m_sc.shape, -jnp.inf, jnp.float32)
        l_sc[...] = jnp.zeros(l_sc.shape, jnp.float32)
        s_sc[...] = jnp.zeros(s_sc.shape, jnp.float32)
        n_sc[...] = jnp.zeros(n_sc.shape, jnp.float32)

    # --- similarity tile: fold 1/T into the query tile, contract last dims on the MXU
    #     in the input dtype with an f32 accumulator (no transpose, no f32 promotion) ---
    fq = fq_ref[...]
    fq = fq * jnp.asarray(inv_temp, fq.dtype)
    sim = jax.lax.dot_general(
        fq, fk_ref[...],
        dimension_numbers=(((1,), (1,)), ((), ())),
        preferred_element_type=jnp.float32)                        # [TQ, TK] f32

    # --- positive-pair mask built in-kernel from labels (cheap VPU compare) ---
    pos = (labq_ref[...] == labk_ref[...]).astype(jnp.float32)     # [TQ, TK]

    # --- online-softmax / running reductions across key tiles ---
    m_prev = m_sc[...]
    m_new = jnp.maximum(m_prev, jnp.max(sim, axis=1, keepdims=True))   # max incl. self (as in torch)
    alpha = jnp.exp(m_prev - m_new)
    l_sc[...] = alpha * l_sc[...] + jnp.sum(jnp.exp(sim - m_new), axis=1, keepdims=True)
    s_sc[...] = s_sc[...] + jnp.sum(pos * sim, axis=1, keepdims=True)
    n_sc[...] = n_sc[...] + jnp.sum(pos, axis=1, keepdims=True)
    m_sc[...] = m_new

    # --- self-contrast exclusion: only diagonal tiles contain self pairs ---
    @pl.when(q == k)
    def _diag_correction():
        r = jax.lax.broadcasted_iota(jnp.int32, sim.shape, 0)
        c = jax.lax.broadcasted_iota(jnp.int32, sim.shape, 1)
        diag_sim = jnp.sum(jnp.where(r == c, sim, 0.0), axis=1, keepdims=True)
        l_sc[...] = l_sc[...] - jnp.exp(diag_sim - m_new)
        s_sc[...] = s_sc[...] - diag_sim          # pos_ii == 1 always
        n_sc[...] = n_sc[...] - 1.0

    # --- finalize:  sum_j mask*log_prob = sum_j mask*logits - mask_sum * LSE_masked ---
    @pl.when(k == nk - 1)
    def _finalize():
        l = l_sc[...]
        # l == 0 only in the degenerate B == 1 case; guard keeps it finite.
        lse = m_sc[...] + jnp.log(jnp.where(l > 0.0, l, 1.0))
        n = n_sc[...]
        denom = jnp.where(n == 0.0, 1.0, n)       # rows with no positives -> 0 loss
        mean_log_prob_pos = (s_sc[...] - n * lse) / denom
        o_ref[...] = (loss_scale * mean_log_prob_pos).astype(o_ref.dtype)


def _supcon_loss_ref(features, mask, temperature=0.07, base_temperature=0.07):
    """Pure-JAX reference (faithful translation of the PyTorch forward, n_views == 1)."""
    B = features.shape[0]
    f = features.astype(jnp.float32)
    sim = jnp.dot(f, f.T, precision=jax.lax.Precision.HIGHEST) / temperature
    logits = sim - jnp.max(sim, axis=1, keepdims=True)
    logits_mask = 1.0 - jnp.eye(B, dtype=jnp.float32)
    mask = mask * logits_mask
    exp_logits = jnp.exp(logits) * logits_mask
    log_prob = logits - jnp.log(jnp.sum(exp_logits, axis=1, keepdims=True))
    mask_sum = jnp.sum(mask, axis=1)
    denom = jnp.where(mask_sum == 0.0, 1.0, mask_sum)
    mean_log_prob_pos = jnp.sum(mask * log_prob, axis=1) / denom
    loss = -(temperature / base_temperature) * mean_log_prob_pos
    return jnp.mean(loss)


def supcon_loss(features, labels=None, mask=None, temperature=0.07,
                contrast_mode="all", base_temperature=0.07, block_size=None):
    """JAX/Pallas forward of SupConLoss for rank-2 `features` [B, D] (n_views == 1)."""
    features = jnp.asarray(features)
    assert features.ndim == 2, "features must be [bsz, dim] (module unsqueezes to n_views == 1)"
    B, D = features.shape
    if contrast_mode not in ("one", "all"):
        raise ValueError(f"Unknown mode: {contrast_mode}")
    # With n_views == 1, 'one' and 'all' are identical.
    if labels is not None and mask is not None:
        raise ValueError("Cannot define both `labels` and `mask`")
    if mask is not None:
        # TODO(synk): arbitrary user-supplied [B,B] masks use a pure-JAX fallback; the
        # Pallas path builds the positive mask in-kernel from integer labels.
        return _supcon_loss_ref(features, jnp.asarray(mask, jnp.float32),
                                temperature, base_temperature)
    if labels is None:
        # SimCLR degenerate case: mask == eye(B)  <=>  every sample is its own class.
        labels = jnp.arange(B, dtype=jnp.int32)
    labels = jnp.asarray(labels).reshape(-1).astype(jnp.int32)
    if labels.shape[0] != B:
        raise ValueError("Num of labels does not match num of features")

    # Tile size: the key-label row block forces the key tile to be a multiple of 128
    # lanes (or the whole batch).  One size is used for both query and key tiles so the
    # self-contrast correction hits exactly the q == k tiles.
    if block_size is None:
        for cand in (512, 256, 128):
            if B % cand == 0:
                block_size = cand
                break
        else:
            block_size = B            # small / odd batches: single whole-problem tile
    T = int(block_size)
    if B % T != 0 or (T != B and T % 128 != 0):
        raise ValueError(f"block_size={T} must divide B={B} and be a multiple of 128 (or equal B)")
    nq = nk = B // T

    labels_col = labels.reshape(B, 1)
    labels_row = labels.reshape(1, B)

    kernel = functools.partial(
        _supcon_kernel,
        inv_temp=1.0 / float(temperature),
        loss_scale=-(float(temperature) / float(base_temperature)))

    # Scoped-VMEM budget from the per-step footprint (double-buffered inputs + f32 tile
    # temporaries + per-row scratch), clamped to generation-safe bounds (v5e/v6e/v7x).
    est = (4 * T * D * features.dtype.itemsize    # 2x double-buffered feature tiles
           + 16 * T                               # label tiles (double buffered)
           + 8 * T * T * 4                        # sim / mask / exp f32 temporaries
           + 8 * T * 4)                           # per-row scratch + output tile
    vmem_limit = int(min(96 * 1024 * 1024, max(32 * 1024 * 1024, 2 * est)))

    per_anchor = pl.pallas_call(
        kernel,
        out_shape=jax.ShapeDtypeStruct((B, 1), jnp.float32),
        grid_spec=pltpu.PrefetchScalarGridSpec(
            num_scalar_prefetch=0,
            grid=(nq, nk),                                    # key (reduction) axis last
            in_specs=[
                pl.BlockSpec((T, 1), lambda q, k: (q, 0)),    # query labels (resident over k)
                pl.BlockSpec((1, T), lambda q, k: (0, k)),    # key labels
                pl.BlockSpec((T, D), lambda q, k: (q, 0)),    # query features (resident over k)
                pl.BlockSpec((T, D), lambda q, k: (k, 0)),    # key features
            ],
            out_specs=pl.BlockSpec((T, 1), lambda q, k: (q, 0)),
            scratch_shapes=[pltpu.VMEM((T, 1), jnp.float32)] * 4,
        ),
        compiler_params=pltpu.CompilerParams(
            dimension_semantics=("parallel", "arbitrary"),
            vmem_limit_bytes=vmem_limit,
        ),
    )(labels_col, labels_row, features, features)

    # Final mean over anchors (anchor_count == 1) — tiny reduction, done in XLA so the
    # row-tile grid axis stays "parallel" across TensorCores.
    return jnp.mean(per_anchor)


if __name__ == "__main__":
    key = jax.random.PRNGKey(0)
    k_f1, k_l1, k_f2, k_l2 = jax.random.split(key, 4)

    # --- small single-tile case (B divides into one whole-problem tile) ---
    B, D = 8, 32
    feats = jax.random.normal(k_f1, (B, D), dtype=jnp.float32)
    feats = feats / jnp.linalg.norm(feats, axis=1, keepdims=True)
    labels = jax.random.randint(k_l1, (B,), 0, 3)

    loss = jax.block_until_ready(supcon_loss(feats, labels=labels))
    mask_ref = (labels[:, None] == labels[None, :]).astype(jnp.float32)
    ref = _supcon_loss_ref(feats, mask_ref)
    assert jnp.allclose(loss, ref, rtol=1e-3, atol=1e-4), (loss, ref)

    # SimCLR degenerate case (no labels / no mask, n_views == 1) -> exactly 0 loss.
    loss0 = jax.block_until_ready(supcon_loss(feats))
    assert jnp.abs(loss0) < 1e-6, loss0

    # --- multi-tile case exercising the online-softmax + diagonal-tile correction ---
    B2, D2 = 256, 32
    feats2 = jax.random.normal(k_f2, (B2, D2), dtype=jnp.float32)
    feats2 = feats2 / jnp.linalg.norm(feats2, axis=1, keepdims=True)
    labels2 = jax.random.randint(k_l2, (B2,), 0, 10)

    loss2 = jax.block_until_ready(supcon_loss(feats2, labels=labels2, block_size=128))
    mask_ref2 = (labels2[:, None] == labels2[None, :]).astype(jnp.float32)
    ref2 = _supcon_loss_ref(feats2, mask_ref2)
    assert jnp.allclose(loss2, ref2, rtol=1e-3, atol=1e-4), (loss2, ref2)

    print("KERNEL_OK")
</pallas_src>

<mosaic_0001>
module attributes {stable_mosaic.version = 11 : i64} {
  func.func @_supcon_kernel(%arg0: i32, %arg1: i32, %arg2: memref<8x1xi32, #tpu.memory_space<vmem>>, %arg3: memref<1x8xi32, #tpu.memory_space<vmem>>, %arg4: memref<8x32xf32, #tpu.memory_space<vmem>>, %arg5: memref<8x32xf32, #tpu.memory_space<vmem>>, %arg6: memref<8x1xf32, #tpu.memory_space<vmem>>, %arg7: memref<8x1xf32, #tpu.memory_space<vmem>>, %arg8: memref<8x1xf32, #tpu.memory_space<vmem>>, %arg9: memref<8x1xf32, #tpu.memory_space<vmem>>, %arg10: memref<8x1xf32, #tpu.memory_space<vmem>>) attributes {dimension_semantics = [#tpu.dimension_semantics<parallel>, #tpu.dimension_semantics<arbitrary>], iteration_bounds = array<i64: 1, 1>, scalar_prefetch = 0 : i64, scratch_operands = 4 : i64, tpu.core_type = #tpu.core_type<tc>, window_params = [{transform_indices = @transform_0, window_bounds = array<i64: 8, 1>}, {transform_indices = @transform_1, window_bounds = array<i64: 1, 8>}, {transform_indices = @transform_2, window_bounds = array<i64: 8, 32>}, {transform_indices = @transform_3, window_bounds = array<i64: 8, 32>}, {transform_indices = @transform_4, window_bounds = array<i64: 8, 1>}]} {
    %c0_i32 = arith.constant 0 : i32
    %0 = arith.cmpi eq, %arg1, %c0_i32 : i32
    %1 = arith.extui %0 : i1 to i32
    %c0_i32_0 = arith.constant 0 : i32
    %2 = arith.cmpi ne, %1, %c0_i32_0 : i32
    scf.if %2 {
      %cst_32 = arith.constant 0xFF800000 : f32
      %48 = vector.broadcast %cst_32 : f32 to vector<8x1xf32>
      %c0_33 = arith.constant 0 : index
      %c0_34 = arith.constant 0 : index
      %49 = vector.load %arg7[%c0_33, %c0_34] : memref<8x1xf32, #tpu.memory_space<vmem>>, vector<8x1xf32>
      tpu.vector_store %arg7[%c0_33, %c0_34], %48 {strides = array<i32>} : memref<8x1xf32, #tpu.memory_space<vmem>>, vector<8x1xf32>,
      %cst_35 = arith.constant 0.000000e+00 : f32
      %50 = vector.broadcast %cst_35 : f32 to vector<8x1xf32>
      %c0_36 = arith.constant 0 : index
      %c0_37 = arith.constant 0 : index
      %51 = vector.load %arg8[%c0_36, %c0_37] : memref<8x1xf32, #tpu.memory_space<vmem>>, vector<8x1xf32>
      tpu.vector_store %arg8[%c0_36, %c0_37], %50 {strides = array<i32>} : memref<8x1xf32, #tpu.memory_space<vmem>>, vector<8x1xf32>,
      %cst_38 = arith.constant 0.000000e+00 : f32
      %52 = vector.broadcast %cst_38 : f32 to vector<8x1xf32>
      %c0_39 = arith.constant 0 : index
      %c0_40 = arith.constant 0 : index
      %53 = vector.load %arg9[%c0_39, %c0_40] : memref<8x1xf32, #tpu.memory_space<vmem>>, vector<8x1xf32>
      tpu.vector_store %arg9[%c0_39, %c0_40], %52 {strides = array<i32>} : memref<8x1xf32, #tpu.memory_space<vmem>>, vector<8x1xf32>,
      %cst_41 = arith.constant 0.000000e+00 : f32
      %54 = vector.broadcast %cst_41 : f32 to vector<8x1xf32>
      %c0_42 = arith.constant 0 : index
      %c0_43 = arith.constant 0 : index
      %55 = vector.load %arg10[%c0_42, %c0_43] : memref<8x1xf32, #tpu.memory_space<vmem>>, vector<8x1xf32>
      tpu.vector_store %arg10[%c0_42, %c0_43], %54 {strides = array<i32>} : memref<8x1xf32, #tpu.memory_space<vmem>>, vector<8x1xf32>,
    } else {
    }
    %c0 = arith.constant 0 : index
    %c0_1 = arith.constant 0 : index
    %3 = vector.load %arg4[%c0, %c0_1] : memref<8x32xf32, #tpu.memory_space<vmem>>, vector<8x32xf32>
    %cst = arith.constant 14.2857141 : f32
    %4 = vector.broadcast %cst : f32 to vector<8x32xf32>
    %5 = arith.mulf %3, %4 : vector<8x32xf32>
    %c0_2 = arith.constant 0 : index
    %c0_3 = arith.constant 0 : index
    %6 = vector.load %arg5[%c0_2, %c0_3] : memref<8x32xf32, #tpu.memory_space<vmem>>, vector<8x32xf32>
    %cst_4 = arith.constant dense<0.000000e+00> : vector<8x8xf32>
    %7 = tpu.matmul %5, %6, %cst_4 {dimension_numbers = #tpu.dot_dimension_numbers<[1], [1], [0], [0], [0, 0, 1, 0], [], []>} : vector<8x32xf32>, vector<8x32xf32>, vector<8x8xf32> -> vector<8x8xf32>
    %c0_5 = arith.constant 0 : index
    %c0_6 = arith.constant 0 : index
    %8 = vector.load %arg2[%c0_5, %c0_6] : memref<8x1xi32, #tpu.memory_space<vmem>>, vector<8x1xi32>
    %c0_7 = arith.constant 0 : index
    %c0_8 = arith.constant 0 : index
    %9 = vector.load %arg3[%c0_7, %c0_8] : memref<1x8xi32, #tpu.memory_space<vmem>>, vector<1x8xi32>
    %10 = vector.broadcast %8 : vector<8x1xi32> to vector<8x8xi32>
    %11 = vector.broadcast %9 : vector<1x8xi32> to vector<8x8xi32>
    %12 = arith.cmpi eq, %10, %11 : vector<8x8xi32>
    %13 = arith.extui %12 : vector<8x8xi1> to vector<8x8xi32>
    %14 = arith.sitofp %13 : vector<8x8xi32> to vector<8x8xf32>
    %c0_9 = arith.constant 0 : index
    %c0_10 = arith.constant 0 : index
    %15 = vector.load %arg7[%c0_9, %c0_10] : memref<8x1xf32, #tpu.memory_space<vmem>>, vector<8x1xf32>
    %cst_11 = arith.constant dense<0xFF800000> : vector<8xf32>
    %16 = vector.multi_reduction <maximumf>, %7, %cst_11 [1] : vector<8x8xf32> to vector<8xf32>
    %17 = vector.shape_cast %16 : vector<8xf32> to vector<8x1xf32>
    %18 = arith.maximumf %15, %17 : vector<8x1xf32>
    %19 = arith.subf %15, %18 : vector<8x1xf32>
    %20 = math.exp %19 : vector<8x1xf32>
    %c0_12 = arith.constant 0 : index
    %c0_13 = arith.constant 0 : index
    %21 = vector.load %arg8[%c0_12, %c0_13] : memref<8x1xf32, #tpu.memory_space<vmem>>, vector<8x1xf32>
    %22 = arith.mulf %20, %21 : vector<8x1xf32>
    %23 = vector.broadcast %18 : vector<8x1xf32> to vector<8x8xf32>
    %24 = arith.subf %7, %23 : vector<8x8xf32>
    %25 = math.exp %24 : vector<8x8xf32>
    %cst_14 = arith.constant dense<0.000000e+00> : vector<8xf32>
    %26 = vector.multi_reduction <add>, %25, %cst_14 [1] : vector<8x8xf32> to vector<8xf32>
    %27 = vector.shape_cast %26 : vector<8xf32> to vector<8x1xf32>
    %28 = arith.addf %22, %27 : vector<8x1xf32>
    %c0_15 = arith.constant 0 : index
    %c0_16 = arith.constant 0 : index
    %29 = vector.load %arg8[%c0_15, %c0_16] : memref<8x1xf32, #tpu.memory_space<vmem>>, vector<8x1xf32>
    tpu.vector_store %arg8[%c0_15, %c0_16], %28 {strides = array<i32>} : memref<8x1xf32, #tpu.memory_space<vmem>>, vector<8x1xf32>,
    %c0_17 = arith.constant 0 : index
    %c0_18 = arith.constant 0 : index
    %30 = vector.load %arg9[%c0_17, %c0_18] : memref<8x1xf32, #tpu.memory_space<vmem>>, vector<8x1xf32>
    %31 = arith.mulf %14, %7 : vector<8x8xf32>
    %cst_19 = arith.constant dense<0.000000e+00> : vector<8xf32>
    %32 = vector.multi_reduction <add>, %31, %cst_19 [1] : vector<8x8xf32> to vector<8xf32>
    %33 = vector.shape_cast %32 : vector<8xf32> to vector<8x1xf32>
    %34 = arith.addf %30, %33 : vector<8x1xf32>
    %c0_20 = arith.constant 0 : index
    %c0_21 = arith.constant 0 : index
    %35 = vector.load %arg9[%c0_20, %c0_21] : memref<8x1xf32, #tpu.memory_space<vmem>>, vector<8x1xf32>
    tpu.vector_store %arg9[%c0_20, %c0_21], %34 {strides = array<i32>} : memref<8x1xf32, #tpu.memory_space<vmem>>, vector<8x1xf32>,
    %c0_22 = arith.constant 0 : index
    %c0_23 = arith.constant 0 : index
    %36 = vector.load %arg10[%c0_22, %c0_23] : memref<8x1xf32, #tpu.memory_space<vmem>>, vector<8x1xf32>
    %cst_24 = arith.constant dense<0.000000e+00> : vector<8xf32>
    %37 = vector.multi_reduction <add>, %14, %cst_24 [1] : vector<8x8xf32> to vector<8xf32>
    %38 = vector.shape_cast %37 : vector<8xf32> to vector<8x1xf32>
    %39 = arith.addf %36, %38 : vector<8x1xf32>
    %c0_25 = arith.constant 0 : index
    %c0_26 = arith.constant 0 : index
    %40 = vector.load %arg10[%c0_25, %c0_26] : memref<8x1xf32, #tpu.memory_space<vmem>>, vector<8x1xf32>
    tpu.vector_store %arg10[%c0_25, %c0_26], %39 {strides = array<i32>} : memref<8x1xf32, #tpu.memory_space<vmem>>, vector<8x1xf32>,
    %c0_27 = arith.constant 0 : index
    %c0_28 = arith.constant 0 : index
    %41 = vector.load %arg7[%c0_27, %c0_28] : memref<8x1xf32, #tpu.memory_space<vmem>>, vector<8x1xf32>
    tpu.vector_store %arg7[%c0_27, %c0_28], %18 {strides = array<i32>} : memref<8x1xf32, #tpu.memory_space<vmem>>, vector<8x1xf32>,
    %42 = arith.cmpi eq, %arg0, %arg1 : i32
    %43 = arith.extui %42 : i1 to i32
    %c0_i32_29 = arith.constant 0 : i32
    %44 = arith.cmpi ne, %43, %c0_i32_29 : i32
    scf.if %44 {
      %48 = tpu.iota {dimensions = array<i32: 0>} : vector<8x8xi32>
      %49 = tpu.iota {dimensions = array<i32: 1>} : vector<8x8xi32>
      %50 = arith.cmpi eq, %48, %49 : vector<8x8xi32>
      %cst_32 = arith.constant 0.000000e+00 : f32
      %51 = vector.broadcast %cst_32 : f32 to vector<8x8xf32>
      %52 = arith.select %50, %7, %51 : vector<8x8xi1>, vector<8x8xf32>
      %cst_33 = arith.constant dense<0.000000e+00> : vector<8xf32>
      %53 = vector.multi_reduction <add>, %52, %cst_33 [1] : vector<8x8xf32> to vector<8xf32>
      %54 = vector.shape_cast %53 : vector<8xf32> to vector<8x1xf32>
      %c0_34 = arith.constant 0 : index
      %c0_35 = arith.constant 0 : index
      %55 = vector.load %arg8[%c0_34, %c0_35] : memref<8x1xf32, #tpu.memory_space<vmem>>, vector<8x1xf32>
      %56 = arith.subf %54, %18 : vector<8x1xf32>
      %57 = math.exp %56 : vector<8x1xf32>
      %58 = arith.subf %55, %57 : vector<8x1xf32>
      %c0_36 = arith.constant 0 : index
      %c0_37 = arith.constant 0 : index
      %59 = vector.load %arg8[%c0_36, %c0_37] : memref<8x1xf32, #tpu.memory_space<vmem>>, vector<8x1xf32>
      tpu.vector_store %arg8[%c0_36, %c0_37], %58 {strides = array<i32>} : memref<8x1xf32, #tpu.memory_space<vmem>>, vector<8x1xf32>,
      %c0_38 = arith.constant 0 : index
      %c0_39 = arith.constant 0 : index
      %60 = vector.load %arg9[%c0_38, %c0_39] : memref<8x1xf32, #tpu.memory_space<vmem>>, vector<8x1xf32>
      %61 = arith.subf %60, %54 : vector<8x1xf32>
      %c0_40 = arith.constant 0 : index
      %c0_41 = arith.constant 0 : index
      %62 = vector.load %arg9[%c0_40, %c0_41] : memref<8x1xf32, #tpu.memory_space<vmem>>, vector<8x1xf32>
      tpu.vector_store %arg9[%c0_40, %c0_41], %61 {strides = array<i32>} : memref<8x1xf32, #tpu.memory_space<vmem>>, vector<8x1xf32>,
      %c0_42 = arith.constant 0 : index
      %c0_43 = arith.constant 0 : index
      %63 = vector.load %arg10[%c0_42, %c0_43] : memref<8x1xf32, #tpu.memory_space<vmem>>, vector<8x1xf32>
      %cst_44 = arith.constant 1.000000e+00 : f32
      %64 = vector.broadcast %cst_44 : f32 to vector<8x1xf32>
      %65 = arith.subf %63, %64 : vector<8x1xf32>
      %c0_45 = arith.constant 0 : index
      %c0_46 = arith.constant 0 : index
      %66 = vector.load %arg10[%c0_45, %c0_46] : memref<8x1xf32, #tpu.memory_space<vmem>>, vector<8x1xf32>
      tpu.vector_store %arg10[%c0_45, %c0_46], %65 {strides = array<i32>} : memref<8x1xf32, #tpu.memory_space<vmem>>, vector<8x1xf32>,
    } else {
    }
    %c0_i32_30 = arith.constant 0 : i32
    %45 = arith.cmpi eq, %arg1, %c0_i32_30 : i32
    %46 = arith.extui %45 : i1 to i32
    %c0_i32_31 = arith.constant 0 : i32
    %47 = arith.cmpi ne, %46, %c0_i32_31 : i32
    scf.if %47 {
      %c0_32 = arith.constant 0 : index
      %c0_33 = arith.constant 0 : index
      %48 = vector.load %arg8[%c0_32, %c0_33] : memref<8x1xf32, #tpu.memory_space<vmem>>, vector<8x1xf32>
      %c0_34 = arith.constant 0 : index
      %c0_35 = arith.constant 0 : index
      %49 = vector.load %arg7[%c0_34, %c0_35] : memref<8x1xf32, #tpu.memory_space<vmem>>, vector<8x1xf32>
      %cst_36 = arith.constant 0.000000e+00 : f32
      %50 = vector.broadcast %cst_36 : f32 to vector<8x1xf32>
      %51 = arith.cmpf ogt, %48, %50 : vector<8x1xf32>
      %cst_37 = arith.constant 1.000000e+00 : f32
      %52 = vector.broadcast %cst_37 : f32 to vector<8x1xf32>
      %53 = arith.select %51, %48, %52 : vector<8x1xi1>, vector<8x1xf32>
      %54 = math.log %53 : vector<8x1xf32>
      %55 = arith.addf %49, %54 : vector<8x1xf32>
      %c0_38 = arith.constant 0 : index
      %c0_39 = arith.constant 0 : index
      %56 = vector.load %arg10[%c0_38, %c0_39] : memref<8x1xf32, #tpu.memory_space<vmem>>, vector<8x1xf32>
      %cst_40 = arith.constant 0.000000e+00 : f32
      %57 = vector.broadcast %cst_40 : f32 to vector<8x1xf32>
      %58 = arith.cmpf oeq, %56, %57 : vector<8x1xf32>
      %cst_41 = arith.constant 1.000000e+00 : f32
      %59 = vector.broadcast %cst_41 : f32 to vector<8x1xf32>
      %60 = arith.select %58, %59, %56 : vector<8x1xi1>, vector<8x1xf32>
      %c0_42 = arith.constant 0 : index
      %c0_43 = arith.constant 0 : index
      %61 = vector.load %arg9[%c0_42, %c0_43] : memref<8x1xf32, #tpu.memory_space<vmem>>, vector<8x1xf32>
      %62 = arith.mulf %56, %55 : vector<8x1xf32>
      %63 = arith.subf %61, %62 : vector<8x1xf32>
      %64 = arith.divf %63, %60 : vector<8x1xf32>
      %cst_44 = arith.constant -1.000000e+00 : f32
      %65 = vector.broadcast %cst_44 : f32 to vector<8x1xf32>
      %66 = arith.mulf %65, %64 : vector<8x1xf32>
      %c0_45 = arith.constant 0 : index
      %c0_46 = arith.constant 0 : index
      %67 = vector.load %arg6[%c0_45, %c0_46] : memref<8x1xf32, #tpu.memory_space<vmem>>, vector<8x1xf32>
      tpu.vector_store %arg6[%c0_45, %c0_46], %66 {strides = array<i32>} : memref<8x1xf32, #tpu.memory_space<vmem>>, vector<8x1xf32>,
    } else {
    }
    return
  }
  func.func @transform_0(%arg0: i32, %arg1: i32) -> (i32, i32) {
    %c0_i32 = arith.constant 0 : i32
    %c0_i32_0 = arith.constant 0 : i32
    return %arg0, %c0_i32 : i32, i32
  }
  func.func @transform_1(%arg0: i32, %arg1: i32) -> (i32, i32) {
    %c0_i32 = arith.constant 0 : i32
    %c0_i32_0 = arith.constant 0 : i32
    return %c0_i32, %arg1 : i32, i32
  }
  func.func @transform_2(%arg0: i32, %arg1: i32) -> (i32, i32) {
    %c0_i32 = arith.constant 0 : i32
    %c0_i32_0 = arith.constant 0 : i32
    return %arg0, %c0_i32 : i32, i32
  }
  func.func @transform_3(%arg0: i32, %arg1: i32) -> (i32, i32) {
    %c0_i32 = arith.constant 0 : i32
    %c0_i32_0 = arith.constant 0 : i32
    return %arg1, %c0_i32 : i32, i32
  }
  func.func @transform_4(%arg0: i32, %arg1: i32) -> (i32, i32) {
    %c0_i32 = arith.constant 0 : i32
    %c0_i32_0 = arith.constant 0 : i32
    return %arg0, %c0_i32 : i32, i32
  }
}

</mosaic_0001>

<llo_original>
// kernel: tpu_custom_call.1
$region0: #{tpu_custom_call.1}
  #allocation0 [shape = 'u32[]', space=smem, size = 0x4, offset = 0x4, fixed_abs, tag = 'smem constant byte address 0x4 - core index']
  #allocation1 [shape = 'u32[144,128]{1,0:T(1,128)}', space=vmem, size = 0x12000, scoped, tag = 'internal scratch']
  #allocation2 [shape = 'f32[8,1]{1,0:T(8,128)}', space=vmem, size = 0x1000, scoped, tag = 'scratch operand']
  #allocation3 [shape = 'f32[8,1]{1,0:T(8,128)}', space=vmem, size = 0x1000, scoped, tag = 'scratch operand']
  #allocation4 [shape = 'f32[8,1]{1,0:T(8,128)}', space=vmem, size = 0x1000, scoped, tag = 'scratch operand']
  #allocation5 [shape = 'f32[8,1]{1,0:T(8,128)}', space=vmem, size = 0x1000, scoped, tag = 'scratch operand']
  %s0 = inlined_call_operand.vmem [shape: s32[8,1], index: 0, kind: input, shape index: {}]
  %s1 = inlined_call_operand.vmem [shape: s32[1,8], index: 1, kind: input, shape index: {}]
  %s2 = inlined_call_operand.vmem [shape: f32[8,32], index: 2, kind: input, shape index: {}]
  %s3 = inlined_call_operand.hbm [shape: f32[8,32], index: 3, kind: input, shape index: {}]
  %s4 = inlined_call_operand.vmem [shape: f32[8,1], index: 4, kind: output, shape index: {}]
  %s5 = sld [smem:[#allocation0]]
  $region42: #{tpu_custom_call.1} parent=0
    _
  %s7 = ssub.s32 1, %s5
  %s8 = scalar_select 0, %s7, %s5
  $region1: #{tpu_custom_call.1} parent=0
    #allocation6 [shape = 'u8[4096]{0}', space=vmem, size = 0x1000, scoped, tag = 'input window, operand 3, single buffered']
    #allocation7 [shape = 's32[1]{0}', space=sflag, size = 0x4, scoped, tag = 'scoped memory for tpu_custom_call.1']
    %9 = vsyncpa [#allocation7], 0
    // Predicated region
    $region2: #{tpu_custom_call.1} parent=1 // pred_check
      _
    $region3: #{tpu_custom_call.1} parent=1 // pred_check_branch
      %11 = sbr.rel (0) target = $region5
    $region4: #{tpu_custom_call.1} parent=1 // pred_region
      _
    $region5: #{tpu_custom_call.1} parent=1 // pred_fallthru
      _
    // Predicated region
    $region6: #{tpu_custom_call.1} parent=1 // pred_check
      _
    $region7: #{tpu_custom_call.1} parent=1 // pred_check_branch
      %13 = sbr.rel (0) target = $region9
    $region8: #{tpu_custom_call.1} parent=1 // pred_region
      _
    $region9: #{tpu_custom_call.1} parent=1 // pred_fallthru
      _
    // Predicated region
    $region10: #{tpu_custom_call.1} parent=1 // pred_check
      _
    $region11: #{tpu_custom_call.1} parent=1 // pred_check_branch
      %15 = sbr.rel (0) target = $region13
    $region12: #{tpu_custom_call.1} parent=1 // pred_region
      _
    $region13: #{tpu_custom_call.1} parent=1 // pred_fallthru
      _
    // Predicated region
    $region14: #{tpu_custom_call.1} parent=1 // pred_check
      _
    $region15: #{tpu_custom_call.1} parent=1 // pred_check_branch
      %17 = sbr.rel (0) target = $region17
    $region16: #{tpu_custom_call.1} parent=1 // pred_region
      %s19 = ssub.s32 128, 128
      %20 = vsyncadd [#allocation7], %s19
      %s22 = sshll.u32 [#allocation6], 4
      %s23 = int_to_ptr.vmem [resolvable:$true] %s22
      %25 = dma.hbm_to_vmem [thread:$0]  %s3, 128, %s23, [#allocation7]
    $region17: #{tpu_custom_call.1} parent=1 // pred_fallthru
      _
    // Predicated region
    $region18: #{tpu_custom_call.1} parent=1 // pred_check
      _
    $region19: #{tpu_custom_call.1} parent=1 // pred_check_branch
      %27 = sbr.rel (0) target = $region21
    $region20: #{tpu_custom_call.1} parent=1 // pred_region
      %28 = dma.done [#allocation7], 128
    $region21: #{tpu_custom_call.1} parent=1 // pred_fallthru
      _
    %p29 = scmp.eq.s32.totalorder 0, 0
    // Predicated region
    $region22: #{tpu_custom_call.1} parent=1 // pred_check
      %p30 = pneg %p29
    $region23: #{tpu_custom_call.1} parent=1 // pred_check_branch
      %32 = sbr.rel (%p30) target = $region25
    $region24: #{tpu_custom_call.1} parent=1 // pred_region
      %vm33 = vcmask 7168
      %34 = vst.msk [vmem:[#allocation2] sm:$0xff] %vm33, -inf
      %35 = vst.msk [vmem:[#allocation3] sm:$0xff] %vm33, 0.0
      %36 = vst.msk [vmem:[#allocation4] sm:$0xff] %vm33, 0.0
      %37 = vst.msk [vmem:[#allocation5] sm:$0xff] %vm33, 0.0
    $region25: #{tpu_custom_call.1} parent=1 // pred_fallthru
      _
    %v38 = vld [vmem:[%s2] sm:$0xff]
    %v39 = vmul.f32 %v38, 14.285714
    %v40 = vld [vmem:[#allocation6] sm:$0xff]
    %vm41 = vcmask 261120
    %v43 = vsel %vm41, %v39, 0
    %v46 = vsel %vm41, %v40, 0
    %48 = vmatprep.subr.mxu0 0.0
    %49 = vmatpush1.xpose.msra.mxu0 0.0
    %50 = vmatprep.subr.mxu0 0.0
    %51 = vmatpush1.xpose.msra.mxu0 0.0
    %52 = vmatprep.subr.mxu0 0.0
    %53 = vmatpush1.xpose.msra.mxu0 0.0
    %54 = vmatprep.subr.mxu0 0.0
    %55 = vmatpush1.xpose.msra.mxu0 0.0
    %56 = vmatprep.subr.mxu0 0.0
    %57 = vmatpush1.xpose.msra.mxu0 0.0
    %58 = vmatprep.subr.mxu0 0.0
    %59 = vmatpush1.xpose.msra.mxu0 0.0
    %60 = vmatprep.subr.mxu0 0.0
    %61 = vmatpush1.xpose.msra.mxu0 0.0
    %62 = vmatprep.subr.mxu0 0.0
    %63 = vmatpush1.xpose.msra.mxu0 0.0
    %64 = vmatprep.subr.mxu0 0.0
    %65 = vmatpush1.xpose.msra.mxu0 0.0
    %66 = vmatprep.subr.mxu0 0.0
    %67 = vmatpush1.xpose.msra.mxu0 0.0
    %68 = vmatprep.subr.mxu0 0.0
    %69 = vmatpush1.xpose.msra.mxu0 0.0
    %70 = vmatprep.subr.mxu0 0.0
    %71 = vmatpush1.xpose.msra.mxu0 0.0
    %72 = vmatprep.subr.mxu0 0.0
    %73 = vmatpush1.xpose.msra.mxu0 0.0
    %74 = vmatprep.subr.mxu0 0.0
    %75 = vmatpush1.xpose.msra.mxu0 0.0
    %76 = vmatprep.subr.mxu0 0.0
    %77 = vmatpush1.xpose.msra.mxu0 0.0
    %78 = vmatprep.subr.mxu0 0.0
    %79 = vmatpush1.xpose.msra.mxu0 %v46
    %80 = vmatprep.subr.mxu0 0.0
    %81 = vmatpush2.xpose.msra.mxu0 0.0
    %82 = vmatprep.subr.mxu0 0.0
    %83 = vmatpush2.xpose.msra.mxu0 0.0
    %84 = vmatprep.subr.mxu0 0.0
    %85 = vmatpush2.xpose.msra.mxu0 0.0
    %86 = vmatprep.subr.mxu0 0.0
    %87 = vmatpush2.xpose.msra.mxu0 0.0
    %88 = vmatprep.subr.mxu0 0.0
    %89 = vmatpush2.xpose.msra.mxu0 0.0
    %90 = vmatprep.subr.mxu0 0.0
    %91 = vmatpush2.xpose.msra.mxu0 0.0
    %92 = vmatprep.subr.mxu0 0.0
    %93 = vmatpush2.xpose.msra.mxu0 0.0
    %94 = vmatprep.subr.mxu0 0.0
    %95 = vmatpush2.xpose.msra.mxu0 0.0
    %96 = vmatprep.subr.mxu0 0.0
    %97 = vmatpush2.xpose.msra.mxu0 0.0
    %98 = vmatprep.subr.mxu0 0.0
    %99 = vmatpush2.xpose.msra.mxu0 0.0
    %100 = vmatprep.subr.mxu0 0.0
    %101 = vmatpush2.xpose.msra.mxu0 0.0
    %102 = vmatprep.subr.mxu0 0.0
    %103 = vmatpush2.xpose.msra.mxu0 0.0
    %104 = vmatprep.subr.mxu0 0.0
    %105 = vmatpush2.xpose.msra.mxu0 0.0
    %106 = vmatprep.subr.mxu0 0.0
    %107 = vmatpush2.xpose.msra.mxu0 0.0
    %108 = vmatprep.subr.mxu0 0.0
    %109 = vmatpush2.xpose.msra.mxu0 0.0
    %110 = vmatprep.subr.mxu0 0.0
    %111 = vmatpush2.xpose.msra.mxu0 0.0
    %112 = vmatprep.mubr.f32.mxu0 0.0
    %113 = vmatmul.mubr.f32.gmra.mxu0 %v43
    %v114 = vpop.f32.mrf.mxu0
    %v115 = vadd.f32 0.0, %v114
    %v116 = vpop.f32.mrf.mxu0
    %117 = vdwg.mxu0
    %v118 = vld [vmem:[%s0] sm:$0xff]
    %v119 = vld [vmem:[%s1] sm:$0x1]
    %120 = vset.pattern.permute.xlu0 0
    %121 = vperm.xlu0 %120, %v118
    %v122 = vpop.permute.xlu0 %121
    %v123 = vlaneseq
    %v124 = vshrl.u32 %v123, 7
    %v125 = vsub.s32 0, %v124
    %v126 = vrot.slane %v119, %v125
    %vm127 = vcmp.eq.s32.totalorder %v122, %v126
    %v128 = vsel %vm127, 1, 0
    %v129 = vcvt.s32.f32 %v128
    %v130 = vld [vmem:[#allocation2] sm:$0xff]
    %vm131 = vcmask 64512
    %v132 = vsel %vm131, %v115, -inf
    %133 = vmax.xlane.f32.xlu0 %v132
    %v134 = vpop.xlane.xlu0 %133
    %v135 = vmax.f32 %v130, %v134
    %v136 = vsub.f32 %v130, %v135
    %v137 = vmul.f32 %v136, 1.442695
    %v138 = vpow.pop %v137
    %v139 = vld [vmem:[#allocation3] sm:$0xff]
    %v140 = vmul.f32 %v138, %v139
    %142 = vset.pattern.permute.xlu0 0
    %143 = vperm.xlu0 %142, %v135
    %v144 = vpop.permute.xlu0 %143
    %v146 = vsub.f32 %v115, %v144
    %v147 = vmul.f32 %v146, 1.442695
    %v148 = vpow.pop %v147
    %v149 = vsel %vm131, %v148, 0.0
    %150 = vadd.xlane.f32.xlu0 %v149
    %v151 = vpop.xlane.xlu0 %150
    %v152 = vadd.f32 %v140, %v151
    %vm153 = vcmask 7168
    %154 = vst.msk [vmem:[#allocation3] sm:$0xff] %vm153, %v152
    %v155 = vld [vmem:[#allocation4] sm:$0xff]
    %v156 = vmul.f32 %v129, %v115
    %v157 = vsel %vm131, %v156, 0.0
    %158 = vadd.xlane.f32.xlu0 %v157
    %v159 = vpop.xlane.xlu0 %158
    %v160 = vadd.f32 %v155, %v159
    %161 = vst.msk [vmem:[#allocation4] sm:$0xff] %vm153, %v160
    %v162 = vld [vmem:[#allocation5] sm:$0xff]
    %v163 = vsel %vm131, %v129, 0.0
    %164 = vadd.xlane.f32.xlu0 %v163
    %v165 = vpop.xlane.xlu0 %164
    %v166 = vadd.f32 %v162, %v165
    %167 = vst.msk [vmem:[#allocation5] sm:$0xff] %vm153, %v166
    %168 = vst.msk [vmem:[#allocation2] sm:$0xff] %vm153, %v135
    %p169 = scmp.eq.s32.totalorder 0, 0
    // Predicated region
    $region26: #{tpu_custom_call.1} parent=1 // pred_check
      %p170 = pneg %p169
    $region27: #{tpu_custom_call.1} parent=1 // pred_check_branch
      %172 = sbr.rel (%p170) target = $region29
    $region28: #{tpu_custom_call.1} parent=1 // pred_region
      %v173 = vlaneseq
      %v174 = vshrl.u32 %v173, 7
      %v175 = vlaneseq
      %v176 = vand.u32 %v175, 127
      %vm177 = vcmp.eq.s32.totalorder %v174, %v176
      %v178 = vsel %vm177, %v115, 0.0
      %v179 = vsel %vm131, %v178, 0.0
      %180 = vadd.xlane.f32.xlu0 %v179
      %v181 = vpop.xlane.xlu0 %180
      %v182 = vld [vmem:[#allocation3] sm:$0xff]
      %v183 = vsub.f32 %v181, %v135
      %v184 = vmul.f32 %v183, 1.442695
      %v185 = vpow.pop %v184
      %v186 = vsub.f32 %v182, %v185
      %187 = vst.msk [vmem:[#allocation3] sm:$0xff] %vm153, %v186
      %v188 = vld [vmem:[#allocation4] sm:$0xff]
      %v189 = vsub.f32 %v188, %v181
      %190 = vst.msk [vmem:[#allocation4] sm:$0xff] %vm153, %v189
      %v191 = vld [vmem:[#allocation5] sm:$0xff]
      %v192 = vsub.f32 %v191, 1.0
      %193 = vst.msk [vmem:[#allocation5] sm:$0xff] %vm153, %v192
    $region29: #{tpu_custom_call.1} parent=1 // pred_fallthru
      _
    // Predicated region
    $region30: #{tpu_custom_call.1} parent=1 // pred_check
      %p194 = pneg %p29
    $region31: #{tpu_custom_call.1} parent=1 // pred_check_branch
      %196 = sbr.rel (%p194) target = $region33
    $region32: #{tpu_custom_call.1} parent=1 // pred_region
      %v197 = vld [vmem:[#allocation3] sm:$0xff]
      %v198 = vld [vmem:[#allocation2] sm:$0xff]
      %vm199 = vcmp.gt.f32.partialorder %v197, 0.0
      %v200 = vsel %vm199, %v197, 1.0
      %v201 = vlog2.pop %v200
      %v202 = vmul.f32 %v201, 0.6931472
      %v203 = vadd.f32 %v198, %v202
      %v204 = vld [vmem:[#allocation5] sm:$0xff]
      %vm205 = vcmp.eq.f32.partialorder %v204, 0.0
      %v206 = vsel %vm205, 1.0, %v204
      %v207 = vld [vmem:[#allocation4] sm:$0xff]
      %v208 = vmul.f32 %v204, %v203
      %v209 = vsub.f32 %v207, %v208
      %v210 = vrcp.pop %v206
      %v211 = vmul.f32 %v209, %v210
      %v212 = vmul.f32 %v211, -1.0
      %213 = vst.msk [vmem:[%s4] sm:$0xff] %vm153, %v212
    $region33: #{tpu_custom_call.1} parent=1 // pred_fallthru
      _
    // Predicated region
    $region34: #{tpu_custom_call.1} parent=1 // pred_check
      _
    $region35: #{tpu_custom_call.1} parent=1 // pred_check_branch
      %215 = sbr.rel (0) target = $region37
    $region36: #{tpu_custom_call.1} parent=1 // pred_region
      _
    $region37: #{tpu_custom_call.1} parent=1 // pred_fallthru
      _
    // Predicated region
    $region38: #{tpu_custom_call.1} parent=1 // pred_check
      _
    $region39: #{tpu_custom_call.1} parent=1 // pred_check_branch
      %217 = sbr.rel (0) target = $region41
    $region40: #{tpu_custom_call.1} parent=1 // pred_region
      _
    $region41: #{tpu_custom_call.1} parent=1 // pred_fallthru
      _
    %218 = vsyncpa [#allocation7], 1

</llo_original>
